<compile_context>
chip_gen: v7x
topology: tpu7x:2x2x1
jax: 0.10.0
libtpu: 0.0.40
codegen_flags: <defaults>
</compile_context>

<pallas_src>
import functools

import jax
import jax.numpy as jnp
from jax.experimental import pallas as pl
from jax.experimental.pallas import tpu as pltpu


def _highway_kernel(x_ref, w_ref, b_ref, out_ref, *, kernel_size, mxu_dtype):
    # x_ref  : (B_tile, L, C)   unpadded input block (also the residual)
    # w_ref  : (K*C, 2*C)       fused im2col weight  [conv_t | conv_z], tap-major rows
    # b_ref  : (1, 2*C)         fused bias           [b_t    | b_z   ]
    # out_ref: (B_tile, L, C)
    B, L, C = x_ref.shape
    K = kernel_size

    x = x_ref[...]                      # residual path, original dtype
    xc = x.astype(mxu_dtype)            # MXU operand dtype (bf16 on v5e/v6e)

    # Causal im2col built in VMEM: tap k uses x shifted down by (K-1-k) rows
    # with a zero prefix (== torch's left pad of K-1).  No padded HBM copy.
    taps = []
    for k in range(K):                  # K is small & static -> unrolled
        s = K - 1 - k
        if s == 0:
            taps.append(xc)
        else:
            zeros = jnp.zeros((B, s, C), dtype=mxu_dtype)
            taps.append(jnp.concatenate([zeros, xc[:, :L - s, :]], axis=1))
    xs = jnp.concatenate(taps, axis=-1)             # (B, L, K*C)
    xs2 = xs.reshape(B * L, K * C)                  # rows for one MXU matmul

    # One fused matmul for conv_t and conv_z, f32 accumulation.
    acc = jnp.dot(xs2, w_ref[...], preferred_element_type=jnp.float32)
    acc = acc + b_ref[...].astype(jnp.float32)      # (B*L, 2C)

    t = jax.nn.sigmoid(acc[:, :C])                  # conv_t half
    z_acc = acc[:, C:]                              # conv_z half
    x_res = x.reshape(B * L, C).astype(jnp.float32)
    z = x_res + t * (z_acc - x_res)                 # == t*z_acc + (1-t)*x

    # NOTE: for C < 128 a lane-dense (L*C/128, 128) store layout would avoid
    # masked partial stores; kept in the natural (B, L, C) layout here to keep
    # lowering simple at these shapes.
    out_ref[...] = z.reshape(B, L, C).astype(out_ref.dtype)


@functools.partial(jax.jit,
                   static_argnames=("kernel_size", "mxu_dtype", "b_tile"))
def highway_block(x_nlc, w_t, b_t, w_z, b_z, *, kernel_size,
                  mxu_dtype=jnp.bfloat16, b_tile=None):
    """x_nlc: (N, L, C); w_*: (C_out, C_in, K) torch Conv1d layout; b_*: (C,)."""
    N, L, C = x_nlc.shape
    K = kernel_size

    # Fuse conv_t / conv_z into one (K*C, 2C) weight, tap-major rows:
    #   row (k*C + c_in), col c_out  <-  w[c_out, c_in, k]
    wt = jnp.transpose(w_t, (2, 1, 0)).reshape(K * C, C)
    wz = jnp.transpose(w_z, (2, 1, 0)).reshape(K * C, C)
    w_cat = jnp.concatenate([wt, wz], axis=-1).astype(mxu_dtype)      # (K*C, 2C)
    b_cat = jnp.concatenate([b_t, b_z]).reshape(1, 2 * C).astype(jnp.float32)

    if b_tile is None:
        # Fill blocks while keeping >= 2 parallel grid steps (2 TCs on v7x).
        half = max(N // 2, 1)
        b_tile = half if N % half == 0 else 1
    assert N % b_tile == 0, "batch must be divisible by the batch tile"
    grid = (N // b_tile,)

    kern = functools.partial(_highway_kernel, kernel_size=K, mxu_dtype=mxu_dtype)

    return pl.pallas_call(
        kern,
        out_shape=jax.ShapeDtypeStruct((N, L, C), x_nlc.dtype),
        grid_spec=pltpu.PrefetchScalarGridSpec(
            num_scalar_prefetch=0,
            grid=grid,
            in_specs=[
                pl.BlockSpec((b_tile, L, C), lambda b: (b, 0, 0)),
                pl.BlockSpec((K * C, 2 * C), lambda b: (0, 0)),
                pl.BlockSpec((1, 2 * C), lambda b: (0, 0)),
            ],
            out_specs=pl.BlockSpec((b_tile, L, C), lambda b: (b, 0, 0)),
        ),
        compiler_params=pltpu.CompilerParams(
            dimension_semantics=("parallel",)),
    )(x_nlc, w_cat, b_cat)


def highway_block_ref(x_nlc, w_t, b_t, w_z, b_z, kernel_size):
    """Pure-JAX reference with identical math (torch Conv1d semantics)."""
    N, L, C = x_nlc.shape
    K = kernel_size
    x_pad = jnp.pad(x_nlc, ((0, 0), (K - 1, 0), (0, 0))).astype(jnp.float32)
    wt = jnp.transpose(w_t, (2, 1, 0)).astype(jnp.float32)
    wz = jnp.transpose(w_z, (2, 1, 0)).astype(jnp.float32)
    acc_t = jnp.broadcast_to(b_t.astype(jnp.float32), (N, L, C))
    acc_z = jnp.broadcast_to(b_z.astype(jnp.float32), (N, L, C))
    for k in range(K):
        xs = x_pad[:, k:k + L, :]
        acc_t = acc_t + jnp.einsum("nli,io->nlo", xs, wt[k])
        acc_z = acc_z + jnp.einsum("nli,io->nlo", xs, wz[k])
    t = jax.nn.sigmoid(acc_t)
    return (t * acc_z + (1.0 - t) * x_nlc.astype(jnp.float32)).astype(x_nlc.dtype)


if __name__ == "__main__":
    # Small shapes consistent with the module: input_dim=32, kernel_size=3,
    # batch=2, sequence length=16.
    N, C, L, K = 2, 32, 16, 3

    key = jax.random.PRNGKey(0)
    kx, kwt, kbt, kwz, kbz = jax.random.split(key, 5)

    # Input in NCW (torch layout), converted to NLC for the kernel.
    x_ncw = jax.random.normal(kx, (N, C, L), dtype=jnp.float32)
    x_nlc = jnp.transpose(x_ncw, (0, 2, 1))

    # Deterministic parameter init (Conv1d weight shape: (C_out, C_in, K)).
    bound = 1.0 / (C * K) ** 0.5
    w_t = jax.random.uniform(kwt, (C, C, K), jnp.float32, -bound, bound)
    b_t = jax.random.uniform(kbt, (C,), jnp.float32, -bound, bound)
    w_z = jax.random.uniform(kwz, (C, C, K), jnp.float32, -bound, bound)
    b_z = jax.random.uniform(kbz, (C,), jnp.float32, -bound, bound)

    ref = highway_block_ref(x_nlc, w_t, b_t, w_z, b_z, K)

    # f32 MXU operands: tight correctness check.
    out_f32 = jax.block_until_ready(
        highway_block(x_nlc, w_t, b_t, w_z, b_z, kernel_size=K,
                      mxu_dtype=jnp.float32))
    assert out_f32.shape == (N, L, C)
    assert jnp.allclose(out_f32, ref, atol=1e-4, rtol=1e-4), "f32 mismatch vs reference"

    # bf16 MXU operands (v5e/v6e fast path), f32 accumulation: relaxed check.
    out_bf16 = jax.block_until_ready(
        highway_block(x_nlc, w_t, b_t, w_z, b_z, kernel_size=K,
                      mxu_dtype=jnp.bfloat16))
    assert out_bf16.shape == (N, L, C)
    assert jnp.allclose(out_bf16, ref, atol=2e-2, rtol=2e-2), "bf16 mismatch vs reference"

    print("KERNEL_OK")
</pallas_src>

<mosaic_0001>
module attributes {stable_mosaic.version = 11 : i64} {
  func.func @_highway_kernel(%arg0: i32, %arg1: memref<1x16x32xf32, #tpu.memory_space<vmem>>, %arg2: memref<96x64xf32, #tpu.memory_space<vmem>>, %arg3: memref<1x64xf32, #tpu.memory_space<vmem>>, %arg4: memref<1x16x32xf32, #tpu.memory_space<vmem>>) attributes {dimension_semantics = [#tpu.dimension_semantics<parallel>], iteration_bounds = array<i64: 2>, scalar_prefetch = 0 : i64, scratch_operands = 0 : i64, tpu.core_type = #tpu.core_type<tc>, window_params = [{transform_indices = @transform_0, window_bounds = array<i64: 1, 16, 32>}, {pipeline_mode = #tpu.pipeline_mode<synchronous>, transform_indices = @transform_1, window_bounds = array<i64: 96, 64>}, {pipeline_mode = #tpu.pipeline_mode<synchronous>, transform_indices = @transform_2, window_bounds = array<i64: 1, 64>}, {transform_indices = @transform_3, window_bounds = array<i64: 1, 16, 32>}]} {
    %c0 = arith.constant 0 : index
    %c0_0 = arith.constant 0 : index
    %c0_1 = arith.constant 0 : index
    %0 = vector.load %arg1[%c0, %c0_0, %c0_1] : memref<1x16x32xf32, #tpu.memory_space<vmem>>, vector<1x16x32xf32>
    %cst = arith.constant 0.000000e+00 : f32
    %1 = vector.broadcast %cst : f32 to vector<1x2x32xf32>
    %2 = vector.extract_strided_slice %0 {offsets = [0, 0, 0], sizes = [1, 14, 32], strides = [1, 1, 1]} : vector<1x16x32xf32> to vector<1x14x32xf32>
    %3 = tpu.concatenate %1, %2 in 1 : vector<1x2x32xf32>, vector<1x14x32xf32> -> vector<1x16x32xf32>
    %cst_2 = arith.constant 0.000000e+00 : f32
    %4 = vector.broadcast %cst_2 : f32 to vector<1x1x32xf32>
    %5 = vector.extract_strided_slice %0 {offsets = [0, 0, 0], sizes = [1, 15, 32], strides = [1, 1, 1]} : vector<1x16x32xf32> to vector<1x15x32xf32>
    %6 = tpu.concatenate %4, %5 in 1 : vector<1x1x32xf32>, vector<1x15x32xf32> -> vector<1x16x32xf32>
    %7 = tpu.concatenate %3, %6, %0 in 2 : vector<1x16x32xf32>, vector<1x16x32xf32>, vector<1x16x32xf32> -> vector<1x16x96xf32>
    %8 = vector.shape_cast %7 : vector<1x16x96xf32> to vector<16x96xf32>
    %c0_3 = arith.constant 0 : index
    %c0_4 = arith.constant 0 : index
    %9 = vector.load %arg2[%c0_3, %c0_4] : memref<96x64xf32, #tpu.memory_space<vmem>>, vector<96x64xf32>
    %cst_5 = arith.constant dense<0.000000e+00> : vector<16x64xf32>
    %10 = tpu.matmul %8, %9, %cst_5 {dimension_numbers = #tpu.dot_dimension_numbers<[1], [0], [0], [1], [0, 0, 1, 1], [], []>} : vector<16x96xf32>, vector<96x64xf32>, vector<16x64xf32> -> vector<16x64xf32>
    %c0_6 = arith.constant 0 : index
    %c0_7 = arith.constant 0 : index
    %11 = vector.load %arg3[%c0_6, %c0_7] : memref<1x64xf32, #tpu.memory_space<vmem>>, vector<1x64xf32>
    %12 = vector.broadcast %11 : vector<1x64xf32> to vector<16x64xf32>
    %13 = arith.addf %10, %12 : vector<16x64xf32>
    %14 = vector.extract_strided_slice %13 {offsets = [0, 0], sizes = [16, 32], strides = [1, 1]} : vector<16x64xf32> to vector<16x32xf32>
    %15 = arith.negf %14 : vector<16x32xf32>
    %16 = math.exp %15 : vector<16x32xf32>
    %cst_8 = arith.constant 1.000000e+00 : f32
    %17 = vector.broadcast %cst_8 : f32 to vector<16x32xf32>
    %18 = arith.addf %17, %16 : vector<16x32xf32>
    %19 = arith.divf %17, %18 : vector<16x32xf32>
    %20 = vector.extract_strided_slice %13 {offsets = [0, 32], sizes = [16, 32], strides = [1, 1]} : vector<16x64xf32> to vector<16x32xf32>
    %21 = vector.shape_cast %0 : vector<1x16x32xf32> to vector<16x32xf32>
    %22 = arith.subf %20, %21 : vector<16x32xf32>
    %23 = arith.mulf %19, %22 : vector<16x32xf32>
    %24 = arith.addf %21, %23 : vector<16x32xf32>
    %25 = vector.shape_cast %24 : vector<16x32xf32> to vector<1x16x32xf32>
    %c0_9 = arith.constant 0 : index
    %c0_10 = arith.constant 0 : index
    %c0_11 = arith.constant 0 : index
    %26 = vector.load %arg4[%c0_9, %c0_10, %c0_11] : memref<1x16x32xf32, #tpu.memory_space<vmem>>, vector<1x16x32xf32>
    tpu.vector_store %arg4[%c0_9, %c0_10, %c0_11], %25 {strides = array<i32>} : memref<1x16x32xf32, #tpu.memory_space<vmem>>, vector<1x16x32xf32>,
    return
  }
  func.func @transform_0(%arg0: i32) -> (i32, i32, i32) {
    %c0_i32 = arith.constant 0 : i32
    %c0_i32_0 = arith.constant 0 : i32
    %c0_i32_1 = arith.constant 0 : i32
    return %arg0, %c0_i32, %c0_i32_0 : i32, i32, i32
  }
  func.func @transform_1(%arg0: i32) -> (i32, i32) {
    %c0_i32 = arith.constant 0 : i32
    %c0_i32_0 = arith.constant 0 : i32
    %c0_i32_1 = arith.constant 0 : i32
    return %c0_i32, %c0_i32_0 : i32, i32
  }
  func.func @transform_2(%arg0: i32) -> (i32, i32) {
    %c0_i32 = arith.constant 0 : i32
    %c0_i32_0 = arith.constant 0 : i32
    %c0_i32_1 = arith.constant 0 : i32
    return %c0_i32, %c0_i32_0 : i32, i32
  }
  func.func @transform_3(%arg0: i32) -> (i32, i32, i32) {
    %c0_i32 = arith.constant 0 : i32
    %c0_i32_0 = arith.constant 0 : i32
    %c0_i32_1 = arith.constant 0 : i32
    return %arg0, %c0_i32, %c0_i32_0 : i32, i32, i32
  }
}

</mosaic_0001>

<llo_original>
// kernel: highway_block.1
$region0: #{highway_block.1}
  #allocation0 [shape = 'u32[]', space=smem, size = 0x4, offset = 0x4, fixed_abs, tag = 'smem constant byte address 0x4 - core index']
  #allocation1 [shape = 'u32[144,128]{1,0:T(1,128)}', space=vmem, size = 0x12000, scoped, tag = 'internal scratch']
  %s0 = inlined_call_operand.vmem [shape: f32[2,16,32], index: 0, kind: input, shape index: {}]
  %s1 = inlined_call_operand.vmem [shape: f32[96,64], index: 1, kind: input, shape index: {}]
  %s2 = inlined_call_operand.vmem [shape: f32[1,64], index: 2, kind: input, shape index: {}]
  %s3 = inlined_call_operand.hbm [shape: f32[2,16,32], index: 3, kind: output, shape index: {}]
  %s4 = sld [smem:[#allocation0]]
  $region45: #{highway_block.1} parent=0
    _
  %s6 = ssub.s32 1, %s4
  %s7 = scalar_select 0, %s6, %s4
  $region1: #{highway_block.1} parent=0
    #allocation2 [shape = 'u8[16384]{0}', space=vmem, size = 0x4000, scoped, tag = 'output window, operand 0']
    #allocation3 [shape = 's32[2]{0}', space=sflag, size = 0x8, scoped, tag = 'scoped memory for highway_block.1']
    %8 = vsyncpa [#allocation3], 0
    %s9 = scalar_lea.sflag [#allocation3], 1
    %10 = vsyncpa %s9, 0
    loop: start=0, step=1, limit=4
    $region2: #{highway_block.1} parent=1 // loop_pre_header
      _
    $region3: #{highway_block.1} parent=1 // loop_header
      %s12 = sphi 0, %s16
      %p13 = scmp.ge.s32.totalorder %s12, 4
      %s22 = sphi 0, %s24
      %s25 = sphi 0, %s22
      %s26 = sphi 0, %s25
      %s42 = sphi 0, %s26
      %s46 = sphi 0, %s46
      %s48 = sphi 0, %s46
      %s49 = sphi 0, %s48
      %s63 = sphi 0, %s49
      %s67 = sphi 0, %s67
      %s69 = sphi 0, %s67
      %s70 = sphi 0, %s69
      %s84 = sphi 0, %s70
      %s90 = sphi 0, %s92
      %s93 = sphi 0, %s90
      %s94 = sphi 0, %s93
      %s110 = sphi 0, %s94
    $region4: #{highway_block.1} parent=1 // loop_header_branch
      %15 = sbr.rel (%p13) target = $region8
    $region5: #{highway_block.1} parent=1 // loop_body
      %s17 = ssub.s32 %s12, 1
      %s18 = ssub.s32 %s12, 2
      %s19 = sadd.s32 %s12, 1
      %s20 = ssub.s32 %s12, %s19
      %p21 = scmp.eq.s32.totalorder %s20, 0
      %s23 = sadd.s32 %s22, 1
      %s24 = scalar_select %p21, %s22, %s23
      %p27 = pneg %p21
      %p28 = scmp.eq.s32.totalorder %s12, 1
      %p29 = por %p27, %p28
      %p30 = scmp.ne.s32.totalorder %s22, %s25
      %p31 = scmp.eq.s32.totalorder %s12, 0
      %p32 = por %p30, %p31
      %p33 = scmp.ne.s32.totalorder %s22, %s25
      %p34 = scmp.eq.s32.totalorder %s17, 1
      %p35 = por %p33, %p34
      %p36 = scmp.ne.s32.totalorder %s25, %s26
      %p37 = scmp.eq.s32.totalorder %s17, 0
      %p38 = por %p36, %p37
      %p39 = scmp.ne.s32.totalorder %s25, %s26
      %p40 = scmp.eq.s32.totalorder %s18, 1
      %p41 = por %p39, %p40
      %p43 = scmp.ne.s32.totalorder %s26, %s42
      %p44 = scmp.eq.s32.totalorder %s18, 0
      %p45 = por %p43, %p44
      %s47 = sadd.s32 %s46, 1
      %p50 = scmp.eq.s32.totalorder %s12, 1
      %p51 = scmp.ne.s32.totalorder %s46, %s48
      %p52 = scmp.eq.s32.totalorder %s12, 0
      %p53 = por %p51, %p52
      %p54 = scmp.ne.s32.totalorder %s46, %s48
      %p55 = scmp.eq.s32.totalorder %s17, 1
      %p56 = por %p54, %p55
      %p57 = scmp.ne.s32.totalorder %s48, %s49
      %p58 = scmp.eq.s32.totalorder %s17, 0
      %p59 = por %p57, %p58
      %p60 = scmp.ne.s32.totalorder %s48, %s49
      %p61 = scmp.eq.s32.totalorder %s18, 1
      %p62 = por %p60, %p61
      %p64 = scmp.ne.s32.totalorder %s49, %s63
      %p65 = scmp.eq.s32.totalorder %s18, 0
      %p66 = por %p64, %p65
      %s68 = sadd.s32 %s67, 1
      %p71 = scmp.eq.s32.totalorder %s12, 1
      %p72 = scmp.ne.s32.totalorder %s67, %s69
      %p73 = scmp.eq.s32.totalorder %s12, 0
      %p74 = por %p72, %p73
      %p75 = scmp.ne.s32.totalorder %s67, %s69
      %p76 = scmp.eq.s32.totalorder %s17, 1
      %p77 = por %p75, %p76
      %p78 = scmp.ne.s32.totalorder %s69, %s70
      %p79 = scmp.eq.s32.totalorder %s17, 0
      %p80 = por %p78, %p79
      %p81 = scmp.ne.s32.totalorder %s69, %s70
      %p82 = scmp.eq.s32.totalorder %s18, 1
      %p83 = por %p81, %p82
      %p85 = scmp.ne.s32.totalorder %s70, %s84
      %p86 = scmp.eq.s32.totalorder %s18, 0
      %p87 = por %p85, %p86
      %s88 = ssub.s32 %s12, %s19
      %p89 = scmp.eq.s32.totalorder %s88, 0
      %s91 = sadd.s32 %s90, 1
      %s92 = scalar_select %p89, %s90, %s91
      %p95 = pneg %p89
      %p96 = scmp.eq.s32.totalorder %s12, 1
      %p97 = por %p95, %p96
      %p98 = scmp.ne.s32.totalorder %s90, %s93
      %p99 = scmp.eq.s32.totalorder %s12, 0
      %p100 = por %p98, %p99
      %p101 = scmp.ne.s32.totalorder %s90, %s93
      %p102 = scmp.eq.s32.totalorder %s17, 1
      %p103 = por %p101, %p102
      %p104 = scmp.ne.s32.totalorder %s93, %s94
      %p105 = scmp.eq.s32.totalorder %s17, 0
      %p106 = por %p104, %p105
      %p107 = scmp.ne.s32.totalorder %s93, %s94
      %p108 = scmp.eq.s32.totalorder %s18, 1
      %p109 = por %p107, %p108
      %p111 = scmp.ne.s32.totalorder %s94, %s110
      %p112 = scmp.eq.s32.totalorder %s18, 0
      %p113 = por %p111, %p112
      %p114 = scmp.le.s32.totalorder 1, %s12
      %p115 = scmp.lt.s32.totalorder %s12, 3
      %p116 = pnand %p114, %p115
      %p117 = pneg %p116
      // Predicated region
      $region9: #{highway_block.1} parent=5 // pred_check
        _
      $region10: #{highway_block.1} parent=5 // pred_check_branch
        %119 = sbr.rel (%p116) target = $region12
      $region11: #{highway_block.1} parent=5 // pred_region
        %s120 = ssub.s32 %s12, 1
        // Predicated region
        $region13: #{highway_block.1} parent=11 // pred_check
          %p121 = pneg %p59
        $region14: #{highway_block.1} parent=11 // pred_check_branch
          %123 = sbr.rel (%p121) target = $region16
        $region15: #{highway_block.1} parent=11 // pred_region
          _
        $region16: #{highway_block.1} parent=11 // pred_fallthru
          _
        // Predicated region
        $region17: #{highway_block.1} parent=11 // pred_check
          %p124 = pneg %p80
        $region18: #{highway_block.1} parent=11 // pred_check_branch
          %126 = sbr.rel (%p124) target = $region20
        $region19: #{highway_block.1} parent=11 // pred_region
          _
        $region20: #{highway_block.1} parent=11 // pred_fallthru
          _
      $region12: #{highway_block.1} parent=5 // pred_fallthru
        _
      %p127 = scmp.lt.s32.totalorder %s12, 2
      // Predicated region
      $region21: #{highway_block.1} parent=5 // pred_check
        %p128 = pneg %p127
      $region22: #{highway_block.1} parent=5 // pred_check_branch
        %130 = sbr.rel (%p128) target = $region24
      $region23: #{highway_block.1} parent=5 // pred_region
        // Predicated region
        $region25: #{highway_block.1} parent=23 // pred_check
          %p131 = pneg %p32
        $region26: #{highway_block.1} parent=23 // pred_check_branch
          %133 = sbr.rel (%p131) target = $region28
        $region27: #{highway_block.1} parent=23 // pred_region
          %p134 = scmp.lt.s32.totalorder %s12, 1
          %s135 = scalar_select %p134, %s12, 1
          %s136 = smul.addr %s135, 2
          %s137 = smul.addr %s136, 8
          %s138 = scalar_lea.vmem %s0, %s137
        $region28: #{highway_block.1} parent=23 // pred_fallthru
          _
      $region24: #{highway_block.1} parent=5 // pred_fallthru
        _
      %p139 = scmp.le.s32.totalorder 1, %s12
      %p140 = scmp.lt.s32.totalorder %s12, 3
      %p141 = pnand %p139, %p140
      %p142 = pneg %p141
      // Predicated region
      $region29: #{highway_block.1} parent=5 // pred_check
        _
      $region30: #{highway_block.1} parent=5 // pred_check_branch
        %144 = sbr.rel (%p141) target = $region32
      $region31: #{highway_block.1} parent=5 // pred_region
        %s145 = ssub.s32 %s12, 1
        %p146 = scmp.lt.s32.totalorder %s17, 1
        %s147 = scalar_select %p146, %s17, 1
        %s148 = smul.addr %s147, 2
        %s149 = smul.addr %s148, 8
        %s150 = scalar_lea.vmem %s0, %s149
        %p151 = pneg %p38
        %p152 = pneg %p35
        %p153 = pneg %p59
        %p154 = pneg %p56
        %p155 = pneg %p80
        %p156 = pneg %p77
        %p157 = pneg %p106
        %p158 = pneg %p103
        %s159 = sand.u32 %s93, 1
        %s160 = scalar_lea.sflag [#allocation3], %s159
        %s161 = sand.u32 %s93, 1
        %s162 = smul.addr %s161, 16
        %s163 = scalar_lea.vmem [#allocation2], %s162
        %p164 = scmp.lt.s32.totalorder %s17, 1
        %s165 = scalar_select %p164, %s17, 1
        %s166 = smul.addr %s165, 2
        %s167 = smul.addr %s166, 8
        %s168 = scalar_lea.vmem %s0, %s167
        %v169 = vld [vmem:[%s168] sm:$0xff]
        %v170 = vld [vmem:[%s168 + $0x8] sm:$0xff]
        %vm173 = vcmask 1041408
        %v174 = vrot.slane %v169, 6
        %v175 = vrot.slane %v170, 6
        %v176 = vsel %vm173, %v174, %v175
        %v179 = vsel %vm173, 0.0, %v174
        %vm180 = vcmask 1040384
        %v181 = vrot.slane %v169, 7
        %v182 = vrot.slane %v170, 7
        %v183 = vsel %vm180, %v181, %v182
        %v185 = vsel %vm180, 0.0, %v181
        %187 = vrot.lane.b32.xlu0 %v185, 32
        %v188 = vpop.permute.xlu0 %187
        %189 = vrot.lane.b32.xlu0 %v183, 32
        %v190 = vpop.permute.xlu0 %189
        %193 = vrot.lane.b32.xlu0 %v169, 64
        %v194 = vpop.permute.xlu0 %193
        %195 = vrot.lane.b32.xlu0 %v170, 64
        %v196 = vpop.permute.xlu0 %195
        %vm199 = vcmask 261120
        %v200 = vsel %vm199, %v179, %v188
        %v201 = vsel %vm199, %v176, %v190
        %vm202 = vcmask 523264
        %v203 = vsel %vm202, %v200, %v194
        %v204 = vsel %vm202, %v201, %v196
        %v205 = vld [vmem:[%s1] sm:$0xff]
        %v206 = vld [vmem:[%s1 + $0x8] sm:$0xff]
        %v207 = vld [vmem:[%s1 + $0x10] sm:$0xff]
        %v208 = vld [vmem:[%s1 + $0x18] sm:$0xff]
        %v209 = vld [vmem:[%s1 + $0x20] sm:$0xff]
        %v210 = vld [vmem:[%s1 + $0x28] sm:$0xff]
        %v211 = vld [vmem:[%s1 + $0x30] sm:$0xff]
        %v212 = vld [vmem:[%s1 + $0x38] sm:$0xff]
        %v213 = vld [vmem:[%s1 + $0x40] sm:$0xff]
        %v214 = vld [vmem:[%s1 + $0x48] sm:$0xff]
        %v215 = vld [vmem:[%s1 + $0x50] sm:$0xff]
        %v216 = vld [vmem:[%s1 + $0x58] sm:$0xff]
        %v217 = vld [vmem:[%s2] sm:$0x1]
        %v219 = vlaneseq
        %v220 = vshrl.u32 %v219, 7
        %v221 = vsub.s32 0, %v220
        %v222 = vrot.slane %v217, %v221
        %vm224 = vcmask 785408
        %v226 = vsel %vm224, %v203, 0
        %v229 = vsel %vm224, %v204, 0
        %231 = vmatprep.subr.mxu0 0.0
        %232 = vmatpush1.msra.mxu0 %v205
        %233 = vmatprep.subr.mxu0 0.0
        %234 = vmatpush1.msra.mxu0 %v206
        %235 = vmatprep.subr.mxu0 0.0
        %236 = vmatpush1.msra.mxu0 %v207
        %237 = vmatprep.subr.mxu0 0.0
        %238 = vmatpush1.msra.mxu0 %v208
        %239 = vmatprep.subr.mxu0 0.0
        %240 = vmatpush1.msra.mxu0 %v209
        %241 = vmatprep.subr.mxu0 0.0
        %242 = vmatpush1.msra.mxu0 %v210
        %243 = vmatprep.subr.mxu0 0.0
        %244 = vmatpush1.msra.mxu0 %v211
        %245 = vmatprep.subr.mxu0 0.0
        %246 = vmatpush1.msra.mxu0 %v212
        %247 = vmatprep.subr.mxu0 0.0
        %248 = vmatpush1.msra.mxu0 %v213
        %249 = vmatprep.subr.mxu0 0.0
        %250 = vmatpush1.msra.mxu0 %v214
        %251 = vmatprep.subr.mxu0 0.0
        %252 = vmatpush1.msra.mxu0 %v215
        %253 = vmatprep.subr.mxu0 0.0
        %254 = vmatpush1.msra.mxu0 %v216
        %255 = vmatprep.subr.mxu0 0.0
        %256 = vmatpush1.msra.mxu0 0.0
        %257 = vmatprep.subr.mxu0 0.0
        %258 = vmatpush1.msra.mxu0 0.0
        %259 = vmatprep.subr.mxu0 0.0
        %260 = vmatpush1.msra.mxu0 0.0
        %261 = vmatprep.subr.mxu0 0.0
        %262 = vmatpush1.msra.mxu0 0.0
        %263 = vmatprep.subr.mxu0 0.0
        %264 = vmatpush1.msra.mxu0 0.0
        %265 = vmatprep.subr.mxu0 0.0
        %266 = vmatpush1.msra.mxu0 0.0
        %267 = vmatprep.subr.mxu0 0.0
        %268 = vmatpush1.msra.mxu0 0.0
        %269 = vmatprep.subr.mxu0 0.0
        %270 = vmatpush1.msra.mxu0 0.0
        %271 = vmatprep.subr.mxu0 0.0
        %272 = vmatpush1.msra.mxu0 0.0
        %273 = vmatprep.subr.mxu0 0.0
        %274 = vmatpush1.msra.mxu0 0.0
        %275 = vmatprep.subr.mxu0 0.0
        %276 = vmatpush1.msra.mxu0 0.0
        %277 = vmatprep.subr.mxu0 0.0
        %278 = vmatpush1.msra.mxu0 0.0
        %279 = vmatprep.subr.mxu0 0.0
        %280 = vmatpush1.msra.mxu0 0.0
        %281 = vmatprep.subr.mxu0 0.0
        %282 = vmatpush1.msra.mxu0 0.0
        %283 = vmatprep.subr.mxu0 0.0
        %284 = vmatpush1.msra.mxu0 0.0
        %285 = vmatprep.subr.mxu0 0.0
        %286 = vmatpush1.msra.mxu0 0.0
        %287 = vmatprep.subr.mxu0 0.0
        %288 = vmatpush1.msra.mxu0 0.0
        %289 = vmatprep.subr.mxu0 0.0
        %290 = vmatpush1.msra.mxu0 0.0
        %291 = vmatprep.subr.mxu0 0.0
        %292 = vmatpush1.msra.mxu0 0.0
        %293 = vmatprep.subr.mxu0 0.0
        %294 = vmatpush1.msra.mxu0 0.0
        %295 = vmatprep.mubr.f32.mxu0 0.0
        %296 = vmatmul.mubr.f32.gmra.mrb[0].mxu0 %v226
        %v297 = vpop.f32.mrb[0].mxu0
        %v298 = vadd.f32 %v222, %v297
        %v299 = vpop.f32.mrb[0].mxu0
        %300 = vmatprep.mubr.f32.mxu0 0.0
        %301 = vmatmul.mubr.f32.gmra.mrb[0].mxu0 %v229
        %v302 = vpop.f32.mrb[0].mxu0
        %v303 = vadd.f32 %v222, %v302
        %v304 = vpop.f32.mrb[0].mxu0
        %305 = vdwg.mxu0
        %v306 = vxor.u32 %v298, 2147483648
        %v307 = vxor.u32 %v303, 2147483648
        %v308 = vmul.f32 %v306, 1.442695
        %v309 = vpow.pop %v308
        %v310 = vmul.f32 %v307, 1.442695
        %v311 = vpow.pop %v310
        %v312 = vadd.f32 %v309, 1.0
        %v313 = vadd.f32 %v311, 1.0
        %v314 = vrcp.pop %v312
        %v315 = vmul.f32 1.0, %v314
        %v316 = vrcp.pop %v313
        %v317 = vmul.f32 1.0, %v316
        %318 = vrot.lane.b32.xlu0 %v169, 32
        %v319 = vpop.permute.xlu0 %318
        %320 = vrot.lane.b32.xlu0 %v170, 32
        %v321 = vpop.permute.xlu0 %320
        %v324 = vsub.f32 %v298, %v319
        %v325 = vsub.f32 %v303, %v321
        %328 = vrot.lane.b32.xlu0 %v324, 96
        %v329 = vpop.permute.xlu0 %328
        %330 = vrot.lane.b32.xlu0 %v325, 96
        %v331 = vpop.permute.xlu0 %330
        %v334 = vmul.f32 %v315, %v329
        %v335 = vmul.f32 %v317, %v331
        %v336 = vadd.f32 %v169, %v334
        %v337 = vadd.f32 %v170, %v335
        %338 = vst.msk [vmem:[%s163] sm:$0xff] %vm199, %v336
        %339 = vst.msk [vmem:[%s163 + $0x8] sm:$0xff] %vm199, %v337
        %s340 = sand.u32 %s93, 1
        %s341 = scalar_lea.sflag [#allocation3], %s340
        %s342 = sand.u32 %s93, 1
        %s343 = smul.addr %s342, 16
        %s344 = scalar_lea.vmem [#allocation2], %s343
        // Predicated region
        $region33: #{highway_block.1} parent=31 // pred_check
          %p345 = pneg %p103
        $region34: #{highway_block.1} parent=31 // pred_check_branch
          %347 = sbr.rel (%p345) target = $region36
        $region35: #{highway_block.1} parent=31 // pred_region
          %s349 = ssub.s32 256, 256
          %350 = vsyncadd %s341, %s349
          %s351 = smul.addr %s17, 2
          %s352 = smul.addr %s351, 128
          %s353 = scalar_lea.hbm %s3, %s352
          %s354 = sshll.u32 %s344, 4
          %s355 = int_to_ptr.vmem [resolvable:$true] %s354
          %360 = dma.vmem_to_hbm [thread:$0]  %s355, 256, %s353, %s341, 128, 128, 8
        $region36: #{highway_block.1} parent=31 // pred_fallthru
          _
      $region32: #{highway_block.1} parent=5 // pred_fallthru
        _
      %p361 = scmp.le.s32.totalorder 2, %s12
      // Predicated region
      $region37: #{highway_block.1} parent=5 // pred_check
        %p362 = pneg %p361
      $region38: #{highway_block.1} parent=5 // pred_check_branch
        %364 = sbr.rel (%p362) target = $region40
      $region39: #{highway_block.1} parent=5 // pred_region
        %s365 = ssub.s32 %s12, 2
        // Predicated region
        $region41: #{highway_block.1} parent=39 // pred_check
          %p366 = pneg %p109
        $region42: #{highway_block.1} parent=39 // pred_check_branch
          %368 = sbr.rel (%p366) target = $region44
        $region43: #{highway_block.1} parent=39 // pred_region
          %s369 = sand.u32 %s94, 1
          %s370 = scalar_lea.sflag [#allocation3], %s369
          %s371 = sand.u32 %s94, 1
          %s372 = smul.addr %s371, 16
          %s373 = scalar_lea.vmem [#allocation2], %s372
          %374 = dma.done %s370, 256
        $region44: #{highway_block.1} parent=39 // pred_fallthru
          _
      $region40: #{highway_block.1} parent=5 // pred_fallthru
        _
    $region6: #{highway_block.1} parent=1 // loop_footer
      %s16 = sadd.s32 1, %s12
    $region7: #{highway_block.1} parent=1 // loop_footer_branch
      %11 = sbr.rel target = $region3
    $region8: #{highway_block.1} parent=1 // loop_exit
      _
    %375 = vsyncpa [#allocation3], 1
    %s376 = scalar_lea.sflag [#allocation3], 1
    %377 = vsyncpa %s376, 1

</llo_original>
